<compile_context>
chip_gen: v6e
topology: v6e:2x2x1
jax: 0.10.0
libtpu: 0.0.40
codegen_flags: <defaults>
</compile_context>

<pallas_src>
import functools

import jax
import jax.numpy as jnp
from jax import lax
from jax.experimental import pallas as pl
from jax.experimental.pallas import tpu as pltpu

_MIB = 1024 * 1024

# Per-generation (tm, ti) defaults chosen from the roofline:
#   v6e needs ~640 f/B -> tm>=768; v7x ~310 f/B -> tm>=512 (but 64 MiB VMEM);
#   v5e ~240 f/B -> tm>=384.
_TILE_DEFAULTS = {
    "v6e": (1024, 512),
    "v7x": (512, 256),
    "v5e": (512, 256),
    "v5p": (768, 512),
    "v4": (512, 256),
    "unknown": (512, 256),
}


def _round_up(x, m):
    return ((x + m - 1) // m) * m


@functools.lru_cache(maxsize=1)
def _chip_info():
    """Returns (generation, vmem_capacity_bytes, num_tensorcores)."""
    gen = "unknown"
    try:
        kind = jax.devices()[0].device_kind.lower()
        if "v7" in kind:
            gen = "v7x"
        elif "v6" in kind:
            gen = "v6e"
        elif "v5" in kind and ("lite" in kind or "v5e" in kind):
            gen = "v5e"
        elif "v5" in kind:
            gen = "v5p"
        elif "v4" in kind:
            gen = "v4"
    except Exception:
        pass

    vmem_cap = None
    try:
        info = pltpu.get_tpu_info()
        vmem_cap = int(getattr(info, "vmem_capacity_bytes", 0)) or None
    except Exception:
        vmem_cap = None
    if vmem_cap is None:
        # Conservative fallbacks: v7x has 64 MiB per TensorCore, older gens 128 MiB.
        vmem_cap = 64 * _MIB if gen in ("v7x", "unknown") else 128 * _MIB

    num_cores = 2 if gen == "v7x" else 1
    return gen, vmem_cap, num_cores


def _pick_ti(intermediate, ti_target):
    """Largest 128-multiple divisor of I that is <= ti_target (avoids weight pad)."""
    if ti_target >= intermediate:
        return intermediate, False
    t = (min(ti_target, intermediate) // 128) * 128
    while t >= 128:
        if intermediate % t == 0:
            return t, False
        t -= 128
    # Rare fallback: I has no 128-multiple divisor <= ti_target -> pad weights.
    return max(128, (ti_target // 128) * 128), True


def _vmem_estimate(tm, ti, d, in_sz, w_sz):
    return (
        2 * tm * d * in_sz        # x tile (double buffered)
        + 2 * 2 * ti * d * w_sz   # w_gate + w_up tiles (double buffered)
        + 2 * d * ti * w_sz       # w_down tile (double buffered)
        + 2 * tm * d * in_sz      # output tile (double buffered)
        + tm * d * 4              # f32 accumulator scratch
        + 4 * tm * ti * 4         # compiler temporaries: gate, up, h, cast
    )


def _ffn_kernel(x_ref, w1_ref, w3_ref, w2_ref, o_ref, acc_ref):
    # x_ref : (tm, D)   tile of flattened input rows
    # w1_ref: (ti, D)   gate projection tile   (intermediateDense,  [out, in])
    # w3_ref: (ti, D)   up   projection tile   (intermediateDense2, [out, in])
    # w2_ref: (D, ti)   down projection tile   (outputDense,        [out, in])
    # o_ref : (tm, D)   output tile (written on last reduction step)
    # acc_ref: (tm, D)  f32 accumulator, resident across the I-grid axis
    k = pl.program_id(1)

    @pl.when(k == 0)
    def _():
        acc_ref[...] = jnp.zeros_like(acc_ref)

    x = x_ref[...]
    w1 = w1_ref[...]
    w3 = w3_ref[...]
    w2 = w2_ref[...]

    # Contract on the "in" axis of the PyTorch-layout weights (no transpose).
    gate = lax.dot_general(x, w1, (((1,), (1,)), ((), ())),
                           preferred_element_type=jnp.float32)
    up = lax.dot_general(x, w3, (((1,), (1,)), ((), ())),
                         preferred_element_type=jnp.float32)
    # silu(gate) * up — elementwise on VPU/EUP, f32.
    h = (gate * jax.nn.sigmoid(gate)) * up

    # Down-projection partial sum over this I tile: (tm, ti) x (D, ti)^T.
    acc_ref[...] += lax.dot_general(h.astype(w2.dtype), w2,
                                    (((1,), (1,)), ((), ())),
                                    preferred_element_type=jnp.float32)

    @pl.when(k == pl.num_programs(1) - 1)
    def _():
        o_ref[...] = acc_ref[...].astype(o_ref.dtype)


@functools.partial(jax.jit, static_argnames=("tm", "ti"))
def llama_feed_forward(x, w_gate, w_up, w_down, *, tm=None, ti=None):
    """x: [B, S, D]; weights in PyTorch Linear layout [out_features, in_features]."""
    B, S, D = x.shape
    I = w_gate.shape[0]
    M = B * S
    x2 = x.reshape(M, D)

    gen, vmem_cap, num_cores = _chip_info()
    tm_def, ti_def = _TILE_DEFAULTS.get(gen, _TILE_DEFAULTS["unknown"])
    tm_target = tm if tm is not None else tm_def
    ti_target = ti if ti is not None else ti_def

    in_sz = jnp.dtype(x.dtype).itemsize
    w_sz = jnp.dtype(w_gate.dtype).itemsize

    # --- ti: prefer a 128-multiple divisor of I (no wrapper-side weight pad). ---
    ti_eff, _ = _pick_ti(I, ti_target)

    # --- tm: clamp for small M, keep 16-aligned (bf16 sublane packing). ---
    tm_eff = min(tm_target, _round_up(M, 16))

    # On multi-TensorCore chips keep the parallel M axis with >= num_cores tiles
    # when M is large enough that per-core tiles stay MXU-friendly.
    if num_cores >= 2:
        while tm_eff >= 512 and pl.cdiv(M, tm_eff) < num_cores:
            tm_eff = _round_up(tm_eff // 2, 16)

    # --- shrink tm until the working set fits comfortably in physical VMEM. ---
    usable_vmem = int(vmem_cap * 0.9)
    while tm_eff > 128 and _vmem_estimate(tm_eff, ti_eff, D, in_sz, w_sz) > usable_vmem:
        tm_eff = _round_up(tm_eff // 2, 16)

    M_pad = _round_up(M, tm_eff)
    I_pad = _round_up(I, ti_eff)

    if M_pad != M:
        x2 = jnp.pad(x2, ((0, M_pad - M), (0, 0)))
    if I_pad != I:
        # Rare fallback (I has no 128-multiple divisor <= ti_target).
        # Zero padding on I is exact: padded h columns are 0.
        w_gate = jnp.pad(w_gate, ((0, I_pad - I), (0, 0)))
        w_up = jnp.pad(w_up, ((0, I_pad - I), (0, 0)))
        w_down = jnp.pad(w_down, ((0, 0), (0, I_pad - I)))

    gm = M_pad // tm_eff
    gk = I_pad // ti_eff

    # Always set the scoped VMEM limit (v5e's default is only 16 MiB), capped at
    # 90% of the chip's physical VMEM (64 MiB per TC on v7x).
    vmem_est = _vmem_estimate(tm_eff, ti_eff, D, in_sz, w_sz)
    vmem_limit = min(usable_vmem, max(int(vmem_est * 3 // 2), 32 * _MIB))

    compiler_params = pltpu.CompilerParams(
        dimension_semantics=("parallel", "arbitrary"),
        vmem_limit_bytes=vmem_limit,
    )

    cost = pl.CostEstimate(
        flops=6 * M_pad * D * I_pad,
        transcendentals=M_pad * I_pad,
        bytes_accessed=int(
            M_pad * D * in_sz * 2                 # x read + out write
            + gm * 3 * I_pad * D * w_sz           # weights re-streamed per M tile
        ),
    )

    out = pl.pallas_call(
        _ffn_kernel,
        out_shape=jax.ShapeDtypeStruct((M_pad, D), x.dtype),
        grid_spec=pltpu.PrefetchScalarGridSpec(
            num_scalar_prefetch=0,
            grid=(gm, gk),
            in_specs=[
                pl.BlockSpec((tm_eff, D), lambda m, k: (m, 0)),   # x rows
                pl.BlockSpec((ti_eff, D), lambda m, k: (k, 0)),   # w_gate tile
                pl.BlockSpec((ti_eff, D), lambda m, k: (k, 0)),   # w_up tile
                pl.BlockSpec((D, ti_eff), lambda m, k: (0, k)),   # w_down tile
            ],
            out_specs=pl.BlockSpec((tm_eff, D), lambda m, k: (m, 0)),
            scratch_shapes=[pltpu.VMEM((tm_eff, D), jnp.float32)],
        ),
        compiler_params=compiler_params,
        cost_estimate=cost,
    )(x2, w_gate, w_up, w_down)

    return out[:M].reshape(B, S, D)


def _reference(x, w_gate, w_up, w_down):
    g = jnp.einsum("bsd,id->bsi", x, w_gate)
    u = jnp.einsum("bsd,id->bsi", x, w_up)
    h = (g * jax.nn.sigmoid(g)) * u
    return jnp.einsum("bsi,di->bsd", h, w_down)


if __name__ == "__main__":
    # Small shapes consistent with the module: batch=2, seq=8, dim=32, intermediate=64.
    B, S, D, I = 2, 8, 32, 64
    key = jax.random.PRNGKey(0)
    kx, k1, k2, k3 = jax.random.split(key, 4)

    x = jax.random.normal(kx, (B, S, D), dtype=jnp.float32)
    # PyTorch Linear layout [out_features, in_features].
    w_gate = jax.random.normal(k1, (I, D), dtype=jnp.float32) * (1.0 / D**0.5)
    w_up = jax.random.normal(k2, (I, D), dtype=jnp.float32) * (1.0 / D**0.5)
    w_down = jax.random.normal(k3, (D, I), dtype=jnp.float32) * (1.0 / I**0.5)

    out = llama_feed_forward(x, w_gate, w_up, w_down)
    out = jax.block_until_ready(out)

    ref = _reference(x, w_gate, w_up, w_down)
    assert out.shape == (B, S, D)
    assert jnp.allclose(out, ref, atol=1e-4, rtol=1e-4), "mismatch vs reference"

    print("KERNEL_OK")
</pallas_src>

<mosaic_0001>
module attributes {stable_mosaic.version = 11 : i64} {
  func.func @_ffn_kernel(%arg0: i32, %arg1: i32, %arg2: memref<16x32xf32, #tpu.memory_space<vmem>>, %arg3: memref<64x32xf32, #tpu.memory_space<vmem>>, %arg4: memref<64x32xf32, #tpu.memory_space<vmem>>, %arg5: memref<32x64xf32, #tpu.memory_space<vmem>>, %arg6: memref<16x32xf32, #tpu.memory_space<vmem>>, %arg7: memref<16x32xf32, #tpu.memory_space<vmem>>) attributes {dimension_semantics = [#tpu.dimension_semantics<parallel>, #tpu.dimension_semantics<arbitrary>], iteration_bounds = array<i64: 1, 1>, scalar_prefetch = 0 : i64, scratch_operands = 1 : i64, tpu.core_type = #tpu.core_type<tc>, window_params = [{transform_indices = @transform_0, window_bounds = array<i64: 16, 32>}, {transform_indices = @transform_1, window_bounds = array<i64: 64, 32>}, {transform_indices = @transform_2, window_bounds = array<i64: 64, 32>}, {transform_indices = @transform_3, window_bounds = array<i64: 32, 64>}, {transform_indices = @transform_4, window_bounds = array<i64: 16, 32>}]} {
    %c0_i32 = arith.constant 0 : i32
    %0 = arith.cmpi eq, %arg1, %c0_i32 : i32
    %1 = arith.extui %0 : i1 to i32
    %c0_i32_0 = arith.constant 0 : i32
    %2 = arith.cmpi ne, %1, %c0_i32_0 : i32
    scf.if %2 {
      %cst_17 = arith.constant 0.000000e+00 : f32
      %23 = vector.broadcast %cst_17 : f32 to vector<16x32xf32>
      %c0_18 = arith.constant 0 : index
      %c0_19 = arith.constant 0 : index
      %24 = vector.load %arg7[%c0_18, %c0_19] : memref<16x32xf32, #tpu.memory_space<vmem>>, vector<16x32xf32>
      tpu.vector_store %arg7[%c0_18, %c0_19], %23 {strides = array<i32>} : memref<16x32xf32, #tpu.memory_space<vmem>>, vector<16x32xf32>,
    } else {
    }
    %c0 = arith.constant 0 : index
    %c0_1 = arith.constant 0 : index
    %3 = vector.load %arg2[%c0, %c0_1] : memref<16x32xf32, #tpu.memory_space<vmem>>, vector<16x32xf32>
    %c0_2 = arith.constant 0 : index
    %c0_3 = arith.constant 0 : index
    %4 = vector.load %arg3[%c0_2, %c0_3] : memref<64x32xf32, #tpu.memory_space<vmem>>, vector<64x32xf32>
    %c0_4 = arith.constant 0 : index
    %c0_5 = arith.constant 0 : index
    %5 = vector.load %arg4[%c0_4, %c0_5] : memref<64x32xf32, #tpu.memory_space<vmem>>, vector<64x32xf32>
    %c0_6 = arith.constant 0 : index
    %c0_7 = arith.constant 0 : index
    %6 = vector.load %arg5[%c0_6, %c0_7] : memref<32x64xf32, #tpu.memory_space<vmem>>, vector<32x64xf32>
    %cst = arith.constant dense<0.000000e+00> : vector<16x64xf32>
    %7 = tpu.matmul %3, %4, %cst {dimension_numbers = #tpu.dot_dimension_numbers<[1], [1], [0], [0], [0, 0, 1, 0], [], []>} : vector<16x32xf32>, vector<64x32xf32>, vector<16x64xf32> -> vector<16x64xf32>
    %cst_8 = arith.constant dense<0.000000e+00> : vector<16x64xf32>
    %8 = tpu.matmul %3, %5, %cst_8 {dimension_numbers = #tpu.dot_dimension_numbers<[1], [1], [0], [0], [0, 0, 1, 0], [], []>} : vector<16x32xf32>, vector<64x32xf32>, vector<16x64xf32> -> vector<16x64xf32>
    %9 = arith.negf %7 : vector<16x64xf32>
    %10 = math.exp %9 : vector<16x64xf32>
    %cst_9 = arith.constant 1.000000e+00 : f32
    %11 = vector.broadcast %cst_9 : f32 to vector<16x64xf32>
    %12 = arith.addf %11, %10 : vector<16x64xf32>
    %13 = arith.divf %11, %12 : vector<16x64xf32>
    %14 = arith.mulf %7, %13 : vector<16x64xf32>
    %15 = arith.mulf %14, %8 : vector<16x64xf32>
    %c0_10 = arith.constant 0 : index
    %c0_11 = arith.constant 0 : index
    %16 = vector.load %arg7[%c0_10, %c0_11] : memref<16x32xf32, #tpu.memory_space<vmem>>, vector<16x32xf32>
    %cst_12 = arith.constant dense<0.000000e+00> : vector<16x32xf32>
    %17 = tpu.matmul %15, %6, %cst_12 {dimension_numbers = #tpu.dot_dimension_numbers<[1], [1], [0], [0], [0, 0, 1, 0], [], []>} : vector<16x64xf32>, vector<32x64xf32>, vector<16x32xf32> -> vector<16x32xf32>
    %18 = arith.addf %16, %17 : vector<16x32xf32>
    %c0_13 = arith.constant 0 : index
    %c0_14 = arith.constant 0 : index
    %19 = vector.load %arg7[%c0_13, %c0_14] : memref<16x32xf32, #tpu.memory_space<vmem>>, vector<16x32xf32>
    tpu.vector_store %arg7[%c0_13, %c0_14], %18 {strides = array<i32>} : memref<16x32xf32, #tpu.memory_space<vmem>>, vector<16x32xf32>,
    %c0_i32_15 = arith.constant 0 : i32
    %20 = arith.cmpi eq, %arg1, %c0_i32_15 : i32
    %21 = arith.extui %20 : i1 to i32
    %c0_i32_16 = arith.constant 0 : i32
    %22 = arith.cmpi ne, %21, %c0_i32_16 : i32
    scf.if %22 {
      %c0_17 = arith.constant 0 : index
      %c0_18 = arith.constant 0 : index
      %23 = vector.load %arg7[%c0_17, %c0_18] : memref<16x32xf32, #tpu.memory_space<vmem>>, vector<16x32xf32>
      %c0_19 = arith.constant 0 : index
      %c0_20 = arith.constant 0 : index
      %24 = vector.load %arg6[%c0_19, %c0_20] : memref<16x32xf32, #tpu.memory_space<vmem>>, vector<16x32xf32>
      tpu.vector_store %arg6[%c0_19, %c0_20], %23 {strides = array<i32>} : memref<16x32xf32, #tpu.memory_space<vmem>>, vector<16x32xf32>,
    } else {
    }
    return
  }
  func.func @transform_0(%arg0: i32, %arg1: i32) -> (i32, i32) {
    %c0_i32 = arith.constant 0 : i32
    %c0_i32_0 = arith.constant 0 : i32
    return %arg0, %c0_i32 : i32, i32
  }
  func.func @transform_1(%arg0: i32, %arg1: i32) -> (i32, i32) {
    %c0_i32 = arith.constant 0 : i32
    %c0_i32_0 = arith.constant 0 : i32
    return %arg1, %c0_i32 : i32, i32
  }
  func.func @transform_2(%arg0: i32, %arg1: i32) -> (i32, i32) {
    %c0_i32 = arith.constant 0 : i32
    %c0_i32_0 = arith.constant 0 : i32
    return %arg1, %c0_i32 : i32, i32
  }
  func.func @transform_3(%arg0: i32, %arg1: i32) -> (i32, i32) {
    %c0_i32 = arith.constant 0 : i32
    %c0_i32_0 = arith.constant 0 : i32
    return %c0_i32, %arg1 : i32, i32
  }
  func.func @transform_4(%arg0: i32, %arg1: i32) -> (i32, i32) {
    %c0_i32 = arith.constant 0 : i32
    %c0_i32_0 = arith.constant 0 : i32
    return %arg0, %c0_i32 : i32, i32
  }
}

</mosaic_0001>

<llo_original>
// kernel: llama_feed_forward.1
$region0: #{llama_feed_forward.1}
  #allocation0 [shape = 'u32[]', space=smem, size = 0x4, offset = 0x4, fixed_abs, tag = 'smem constant byte address 0x4 - core index']
  #allocation1 [shape = 'u32[144,128]{1,0:T(1,128)}', space=vmem, size = 0x12000, scoped, tag = 'internal scratch']
  #allocation2 [shape = 'f32[16,32]{1,0:T(8,128)}', space=vmem, size = 0x2000, scoped, tag = 'scratch operand']
  %s0 = inlined_call_operand.vmem [shape: f32[16,32], index: 0, kind: input, shape index: {}]
  %s1 = inlined_call_operand.vmem [shape: f32[64,32], index: 1, kind: input, shape index: {}]
  %s2 = inlined_call_operand.vmem [shape: f32[64,32], index: 2, kind: input, shape index: {}]
  %s3 = inlined_call_operand.vmem [shape: f32[32,64], index: 3, kind: input, shape index: {}]
  %s4 = inlined_call_operand.hbm [shape: f32[16,32], index: 4, kind: output, shape index: {}]
  %s5 = sld [smem:[#allocation0]]
  $region34: #{llama_feed_forward.1} parent=0
    _
  %s7 = ssub.s32 1, %s5
  %s8 = scalar_select 0, %s7, %s5
  $region1: #{llama_feed_forward.1} parent=0
    #allocation3 [shape = 'u8[8192]{0}', space=vmem, size = 0x2000, scoped, tag = 'output window, operand 0, single buffered']
    #allocation4 [shape = 's32[1]{0}', space=sflag, size = 0x4, scoped, tag = 'scoped memory for llama_feed_forward.1']
    %9 = vsyncpa [#allocation4], 0
    // Predicated region
    $region2: #{llama_feed_forward.1} parent=1 // pred_check
      _
    $region3: #{llama_feed_forward.1} parent=1 // pred_check_branch
      %11 = sbr.rel (0) target = $region5
    $region4: #{llama_feed_forward.1} parent=1 // pred_region
      _
    $region5: #{llama_feed_forward.1} parent=1 // pred_fallthru
      _
    // Predicated region
    $region6: #{llama_feed_forward.1} parent=1 // pred_check
      _
    $region7: #{llama_feed_forward.1} parent=1 // pred_check_branch
      %13 = sbr.rel (0) target = $region9
    $region8: #{llama_feed_forward.1} parent=1 // pred_region
      _
    $region9: #{llama_feed_forward.1} parent=1 // pred_fallthru
      _
    // Predicated region
    $region10: #{llama_feed_forward.1} parent=1 // pred_check
      _
    $region11: #{llama_feed_forward.1} parent=1 // pred_check_branch
      %15 = sbr.rel (0) target = $region13
    $region12: #{llama_feed_forward.1} parent=1 // pred_region
      _
    $region13: #{llama_feed_forward.1} parent=1 // pred_fallthru
      _
    // Predicated region
    $region14: #{llama_feed_forward.1} parent=1 // pred_check
      _
    $region15: #{llama_feed_forward.1} parent=1 // pred_check_branch
      %17 = sbr.rel (0) target = $region17
    $region16: #{llama_feed_forward.1} parent=1 // pred_region
      _
    $region17: #{llama_feed_forward.1} parent=1 // pred_fallthru
      _
    %p18 = scmp.eq.s32.totalorder 0, 0
    // Predicated region
    $region18: #{llama_feed_forward.1} parent=1 // pred_check
      %p19 = pneg %p18
    $region19: #{llama_feed_forward.1} parent=1 // pred_check_branch
      %21 = sbr.rel (%p19) target = $region21
    $region20: #{llama_feed_forward.1} parent=1 // pred_region
      %vm22 = vcmask 261120
      %23 = vst.msk [vmem:[#allocation2] sm:$0xff] %vm22, 0.0
      %24 = vst.msk [vmem:[#allocation2 + $0x8] sm:$0xff] %vm22, 0.0
    $region21: #{llama_feed_forward.1} parent=1 // pred_fallthru
      _
    %v25 = vld [vmem:[%s0] sm:$0xff]
    %v26 = vld [vmem:[%s0 + $0x8] sm:$0xff]
    %v27 = vld [vmem:[%s1] sm:$0xff]
    %v28 = vld [vmem:[%s1 + $0x8] sm:$0xff]
    %v29 = vld [vmem:[%s1 + $0x10] sm:$0xff]
    %v30 = vld [vmem:[%s1 + $0x18] sm:$0xff]
    %v31 = vld [vmem:[%s1 + $0x20] sm:$0xff]
    %v32 = vld [vmem:[%s1 + $0x28] sm:$0xff]
    %v33 = vld [vmem:[%s1 + $0x30] sm:$0xff]
    %v34 = vld [vmem:[%s1 + $0x38] sm:$0xff]
    %v35 = vld [vmem:[%s2] sm:$0xff]
    %v36 = vld [vmem:[%s2 + $0x8] sm:$0xff]
    %v37 = vld [vmem:[%s2 + $0x10] sm:$0xff]
    %v38 = vld [vmem:[%s2 + $0x18] sm:$0xff]
    %v39 = vld [vmem:[%s2 + $0x20] sm:$0xff]
    %v40 = vld [vmem:[%s2 + $0x28] sm:$0xff]
    %v41 = vld [vmem:[%s2 + $0x30] sm:$0xff]
    %v42 = vld [vmem:[%s2 + $0x38] sm:$0xff]
    %v43 = vld [vmem:[%s3] sm:$0xff]
    %v44 = vld [vmem:[%s3 + $0x8] sm:$0xff]
    %v45 = vld [vmem:[%s3 + $0x10] sm:$0xff]
    %v46 = vld [vmem:[%s3 + $0x18] sm:$0xff]
    %vm47 = vcmask 261120
    %v49 = vsel %vm47, %v25, 0
    %v52 = vsel %vm47, %v26, 0
    %v55 = vsel %vm47, %v27, 0
    %v58 = vsel %vm47, %v28, 0
    %v61 = vsel %vm47, %v29, 0
    %v64 = vsel %vm47, %v30, 0
    %v67 = vsel %vm47, %v31, 0
    %v70 = vsel %vm47, %v32, 0
    %v73 = vsel %vm47, %v33, 0
    %v76 = vsel %vm47, %v34, 0
    %78 = vmatprep.subr.mxu0 0.0
    %79 = vmatpush1.xpose.msra.mxu0 0.0
    %80 = vmatprep.subr.mxu0 0.0
    %81 = vmatpush1.xpose.msra.mxu0 0.0
    %82 = vmatprep.subr.mxu0 0.0
    %83 = vmatpush1.xpose.msra.mxu0 0.0
    %84 = vmatprep.subr.mxu0 0.0
    %85 = vmatpush1.xpose.msra.mxu0 0.0
    %86 = vmatprep.subr.mxu0 0.0
    %87 = vmatpush1.xpose.msra.mxu0 0.0
    %88 = vmatprep.subr.mxu0 0.0
    %89 = vmatpush1.xpose.msra.mxu0 0.0
    %90 = vmatprep.subr.mxu0 0.0
    %91 = vmatpush1.xpose.msra.mxu0 0.0
    %92 = vmatprep.subr.mxu0 0.0
    %93 = vmatpush1.xpose.msra.mxu0 0.0
    %94 = vmatprep.subr.mxu0 0.0
    %95 = vmatpush1.xpose.msra.mxu0 %v76
    %96 = vmatprep.subr.mxu0 0.0
    %97 = vmatpush1.xpose.msra.mxu0 %v73
    %98 = vmatprep.subr.mxu0 0.0
    %99 = vmatpush1.xpose.msra.mxu0 %v70
    %100 = vmatprep.subr.mxu0 0.0
    %101 = vmatpush1.xpose.msra.mxu0 %v67
    %102 = vmatprep.subr.mxu0 0.0
    %103 = vmatpush1.xpose.msra.mxu0 %v64
    %104 = vmatprep.subr.mxu0 0.0
    %105 = vmatpush1.xpose.msra.mxu0 %v61
    %106 = vmatprep.subr.mxu0 0.0
    %107 = vmatpush1.xpose.msra.mxu0 %v58
    %108 = vmatprep.subr.mxu0 0.0
    %109 = vmatpush1.xpose.msra.mxu0 %v55
    %110 = vmatprep.subr.mxu0 0.0
    %111 = vmatpush2.xpose.msra.mxu0 0.0
    %112 = vmatprep.subr.mxu0 0.0
    %113 = vmatpush2.xpose.msra.mxu0 0.0
    %114 = vmatprep.subr.mxu0 0.0
    %115 = vmatpush2.xpose.msra.mxu0 0.0
    %116 = vmatprep.subr.mxu0 0.0
    %117 = vmatpush2.xpose.msra.mxu0 0.0
    %118 = vmatprep.subr.mxu0 0.0
    %119 = vmatpush2.xpose.msra.mxu0 0.0
    %120 = vmatprep.subr.mxu0 0.0
    %121 = vmatpush2.xpose.msra.mxu0 0.0
    %122 = vmatprep.subr.mxu0 0.0
    %123 = vmatpush2.xpose.msra.mxu0 0.0
    %124 = vmatprep.subr.mxu0 0.0
    %125 = vmatpush2.xpose.msra.mxu0 0.0
    %126 = vmatprep.subr.mxu0 0.0
    %127 = vmatpush2.xpose.msra.mxu0 0.0
    %128 = vmatprep.subr.mxu0 0.0
    %129 = vmatpush2.xpose.msra.mxu0 0.0
    %130 = vmatprep.subr.mxu0 0.0
    %131 = vmatpush2.xpose.msra.mxu0 0.0
    %132 = vmatprep.subr.mxu0 0.0
    %133 = vmatpush2.xpose.msra.mxu0 0.0
    %134 = vmatprep.subr.mxu0 0.0
    %135 = vmatpush2.xpose.msra.mxu0 0.0
    %136 = vmatprep.subr.mxu0 0.0
    %137 = vmatpush2.xpose.msra.mxu0 0.0
    %138 = vmatprep.subr.mxu0 0.0
    %139 = vmatpush2.xpose.msra.mxu0 0.0
    %140 = vmatprep.subr.mxu0 0.0
    %141 = vmatpush2.xpose.msra.mxu0 0.0
    %142 = vmatprep.mubr.f32.mxu0 0.0
    %143 = vmatmul.mubr.f32.gmra.mxu0 %v49
    %v144 = vpop.f32.mrf.mxu0
    %v145 = vadd.f32 0.0, %v144
    %v146 = vpop.f32.mrf.mxu0
    %147 = vmatprep.mubr.f32.mxu0 0.0
    %148 = vmatmul.mubr.f32.gmra.mxu0 %v52
    %v149 = vpop.f32.mrf.mxu0
    %v150 = vadd.f32 0.0, %v149
    %v151 = vpop.f32.mrf.mxu0
    %152 = vdwg.mxu0
    %v154 = vsel %vm47, %v35, 0
    %v157 = vsel %vm47, %v36, 0
    %v160 = vsel %vm47, %v37, 0
    %v163 = vsel %vm47, %v38, 0
    %v166 = vsel %vm47, %v39, 0
    %v169 = vsel %vm47, %v40, 0
    %v172 = vsel %vm47, %v41, 0
    %v175 = vsel %vm47, %v42, 0
    %177 = vmatprep.subr.mxu0 0.0
    %178 = vmatpush1.xpose.msra.mxu0 0.0
    %179 = vmatprep.subr.mxu0 0.0
    %180 = vmatpush1.xpose.msra.mxu0 0.0
    %181 = vmatprep.subr.mxu0 0.0
    %182 = vmatpush1.xpose.msra.mxu0 0.0
    %183 = vmatprep.subr.mxu0 0.0
    %184 = vmatpush1.xpose.msra.mxu0 0.0
    %185 = vmatprep.subr.mxu0 0.0
    %186 = vmatpush1.xpose.msra.mxu0 0.0
    %187 = vmatprep.subr.mxu0 0.0
    %188 = vmatpush1.xpose.msra.mxu0 0.0
    %189 = vmatprep.subr.mxu0 0.0
    %190 = vmatpush1.xpose.msra.mxu0 0.0
    %191 = vmatprep.subr.mxu0 0.0
    %192 = vmatpush1.xpose.msra.mxu0 0.0
    %193 = vmatprep.subr.mxu0 0.0
    %194 = vmatpush1.xpose.msra.mxu0 %v175
    %195 = vmatprep.subr.mxu0 0.0
    %196 = vmatpush1.xpose.msra.mxu0 %v172
    %197 = vmatprep.subr.mxu0 0.0
    %198 = vmatpush1.xpose.msra.mxu0 %v169
    %199 = vmatprep.subr.mxu0 0.0
    %200 = vmatpush1.xpose.msra.mxu0 %v166
    %201 = vmatprep.subr.mxu0 0.0
    %202 = vmatpush1.xpose.msra.mxu0 %v163
    %203 = vmatprep.subr.mxu0 0.0
    %204 = vmatpush1.xpose.msra.mxu0 %v160
    %205 = vmatprep.subr.mxu0 0.0
    %206 = vmatpush1.xpose.msra.mxu0 %v157
    %207 = vmatprep.subr.mxu0 0.0
    %208 = vmatpush1.xpose.msra.mxu0 %v154
    %209 = vmatprep.subr.mxu0 0.0
    %210 = vmatpush2.xpose.msra.mxu0 0.0
    %211 = vmatprep.subr.mxu0 0.0
    %212 = vmatpush2.xpose.msra.mxu0 0.0
    %213 = vmatprep.subr.mxu0 0.0
    %214 = vmatpush2.xpose.msra.mxu0 0.0
    %215 = vmatprep.subr.mxu0 0.0
    %216 = vmatpush2.xpose.msra.mxu0 0.0
    %217 = vmatprep.subr.mxu0 0.0
    %218 = vmatpush2.xpose.msra.mxu0 0.0
    %219 = vmatprep.subr.mxu0 0.0
    %220 = vmatpush2.xpose.msra.mxu0 0.0
    %221 = vmatprep.subr.mxu0 0.0
    %222 = vmatpush2.xpose.msra.mxu0 0.0
    %223 = vmatprep.subr.mxu0 0.0
    %224 = vmatpush2.xpose.msra.mxu0 0.0
    %225 = vmatprep.subr.mxu0 0.0
    %226 = vmatpush2.xpose.msra.mxu0 0.0
    %227 = vmatprep.subr.mxu0 0.0
    %228 = vmatpush2.xpose.msra.mxu0 0.0
    %229 = vmatprep.subr.mxu0 0.0
    %230 = vmatpush2.xpose.msra.mxu0 0.0
    %231 = vmatprep.subr.mxu0 0.0
    %232 = vmatpush2.xpose.msra.mxu0 0.0
    %233 = vmatprep.subr.mxu0 0.0
    %234 = vmatpush2.xpose.msra.mxu0 0.0
    %235 = vmatprep.subr.mxu0 0.0
    %236 = vmatpush2.xpose.msra.mxu0 0.0
    %237 = vmatprep.subr.mxu0 0.0
    %238 = vmatpush2.xpose.msra.mxu0 0.0
    %239 = vmatprep.subr.mxu0 0.0
    %240 = vmatpush2.xpose.msra.mxu0 0.0
    %241 = vmatprep.mubr.f32.mxu0 0.0
    %242 = vmatmul.mubr.f32.gmra.mxu0 %v49
    %v243 = vpop.f32.mrf.mxu0
    %v244 = vadd.f32 0.0, %v243
    %v245 = vpop.f32.mrf.mxu0
    %246 = vmatprep.mubr.f32.mxu0 0.0
    %247 = vmatmul.mubr.f32.gmra.mxu0 %v52
    %v248 = vpop.f32.mrf.mxu0
    %v249 = vadd.f32 0.0, %v248
    %v250 = vpop.f32.mrf.mxu0
    %251 = vdwg.mxu0
    %v252 = vxor.u32 %v145, 2147483648
    %v253 = vxor.u32 %v150, 2147483648
    %v254 = vmul.f32 %v252, 1.442695
    %v255 = vpow.pop %v254
    %v256 = vmul.f32 %v253, 1.442695
    %v257 = vpow.pop %v256
    %v258 = vadd.f32 %v255, 1.0
    %v259 = vadd.f32 %v257, 1.0
    %v260 = vrcp.pop %v258
    %v261 = vmul.f32 1.0, %v260
    %v262 = vrcp.pop %v259
    %v263 = vmul.f32 1.0, %v262
    %v264 = vmul.f32 %v145, %v261
    %v265 = vmul.f32 %v150, %v263
    %v266 = vmul.f32 %v264, %v244
    %v267 = vmul.f32 %v265, %v249
    %v268 = vld [vmem:[#allocation2] sm:$0xff]
    %v269 = vld [vmem:[#allocation2 + $0x8] sm:$0xff]
    %vm270 = vcmask 523264
    %v272 = vsel %vm270, %v266, 0
    %v275 = vsel %vm270, %v267, 0
    %v278 = vsel %vm270, %v43, 0
    %v281 = vsel %vm270, %v44, 0
    %v284 = vsel %vm270, %v45, 0
    %v287 = vsel %vm270, %v46, 0
    %289 = vmatprep.subr.mxu0 0.0
    %290 = vmatpush1.xpose.msra.mxu0 0.0
    %291 = vmatprep.subr.mxu0 0.0
    %292 = vmatpush1.xpose.msra.mxu0 0.0
    %293 = vmatprep.subr.mxu0 0.0
    %294 = vmatpush1.xpose.msra.mxu0 0.0
    %295 = vmatprep.subr.mxu0 0.0
    %296 = vmatpush1.xpose.msra.mxu0 0.0
    %297 = vmatprep.subr.mxu0 0.0
    %298 = vmatpush1.xpose.msra.mxu0 0.0
    %299 = vmatprep.subr.mxu0 0.0
    %300 = vmatpush1.xpose.msra.mxu0 0.0
    %301 = vmatprep.subr.mxu0 0.0
    %302 = vmatpush1.xpose.msra.mxu0 0.0
    %303 = vmatprep.subr.mxu0 0.0
    %304 = vmatpush1.xpose.msra.mxu0 0.0
    %305 = vmatprep.subr.mxu0 0.0
    %306 = vmatpush1.xpose.msra.mxu0 0.0
    %307 = vmatprep.subr.mxu0 0.0
    %308 = vmatpush1.xpose.msra.mxu0 0.0
    %309 = vmatprep.subr.mxu0 0.0
    %310 = vmatpush1.xpose.msra.mxu0 0.0
    %311 = vmatprep.subr.mxu0 0.0
    %312 = vmatpush1.xpose.msra.mxu0 0.0
    %313 = vmatprep.subr.mxu0 0.0
    %314 = vmatpush1.xpose.msra.mxu0 %v287
    %315 = vmatprep.subr.mxu0 0.0
    %316 = vmatpush1.xpose.msra.mxu0 %v284
    %317 = vmatprep.subr.mxu0 0.0
    %318 = vmatpush1.xpose.msra.mxu0 %v281
    %319 = vmatprep.subr.mxu0 0.0
    %320 = vmatpush1.xpose.msra.mxu0 %v278
    %321 = vmatprep.subr.mxu0 0.0
    %322 = vmatpush2.xpose.msra.mxu0 0.0
    %323 = vmatprep.subr.mxu0 0.0
    %324 = vmatpush2.xpose.msra.mxu0 0.0
    %325 = vmatprep.subr.mxu0 0.0
    %326 = vmatpush2.xpose.msra.mxu0 0.0
    %327 = vmatprep.subr.mxu0 0.0
    %328 = vmatpush2.xpose.msra.mxu0 0.0
    %329 = vmatprep.subr.mxu0 0.0
    %330 = vmatpush2.xpose.msra.mxu0 0.0
    %331 = vmatprep.subr.mxu0 0.0
    %332 = vmatpush2.xpose.msra.mxu0 0.0
    %333 = vmatprep.subr.mxu0 0.0
    %334 = vmatpush2.xpose.msra.mxu0 0.0
    %335 = vmatprep.subr.mxu0 0.0
    %336 = vmatpush2.xpose.msra.mxu0 0.0
    %337 = vmatprep.subr.mxu0 0.0
    %338 = vmatpush2.xpose.msra.mxu0 0.0
    %339 = vmatprep.subr.mxu0 0.0
    %340 = vmatpush2.xpose.msra.mxu0 0.0
    %341 = vmatprep.subr.mxu0 0.0
    %342 = vmatpush2.xpose.msra.mxu0 0.0
    %343 = vmatprep.subr.mxu0 0.0
    %344 = vmatpush2.xpose.msra.mxu0 0.0
    %345 = vmatprep.subr.mxu0 0.0
    %346 = vmatpush2.xpose.msra.mxu0 0.0
    %347 = vmatprep.subr.mxu0 0.0
    %348 = vmatpush2.xpose.msra.mxu0 0.0
    %349 = vmatprep.subr.mxu0 0.0
    %350 = vmatpush2.xpose.msra.mxu0 0.0
    %351 = vmatprep.subr.mxu0 0.0
    %352 = vmatpush2.xpose.msra.mxu0 0.0
    %353 = vmatprep.mubr.f32.mxu0 0.0
    %354 = vmatmul.mubr.f32.gmra.mxu0 %v272
    %v355 = vpop.f32.mrf.mxu0
    %v356 = vadd.f32 0.0, %v355
    %v357 = vpop.f32.mrf.mxu0
    %358 = vmatprep.mubr.f32.mxu0 0.0
    %359 = vmatmul.mubr.f32.gmra.mxu0 %v275
    %v360 = vpop.f32.mrf.mxu0
    %v361 = vadd.f32 0.0, %v360
    %v362 = vpop.f32.mrf.mxu0
    %363 = vdwg.mxu0
    %v364 = vadd.f32 %v268, %v356
    %v365 = vadd.f32 %v269, %v361
    %366 = vst.msk [vmem:[#allocation2] sm:$0xff] %vm47, %v364
    %367 = vst.msk [vmem:[#allocation2 + $0x8] sm:$0xff] %vm47, %v365
    // Predicated region
    $region22: #{llama_feed_forward.1} parent=1 // pred_check
      %p368 = pneg %p18
    $region23: #{llama_feed_forward.1} parent=1 // pred_check_branch
      %370 = sbr.rel (%p368) target = $region25
    $region24: #{llama_feed_forward.1} parent=1 // pred_region
      %v371 = vld [vmem:[#allocation2] sm:$0xff]
      %v372 = vld [vmem:[#allocation2 + $0x8] sm:$0xff]
      %373 = vst.msk [vmem:[#allocation3] sm:$0xff] %vm47, %v371
      %374 = vst.msk [vmem:[#allocation3 + $0x8] sm:$0xff] %vm47, %v372
    $region25: #{llama_feed_forward.1} parent=1 // pred_fallthru
      _
    // Predicated region
    $region26: #{llama_feed_forward.1} parent=1 // pred_check
      _
    $region27: #{llama_feed_forward.1} parent=1 // pred_check_branch
      %376 = sbr.rel (0) target = $region29
    $region28: #{llama_feed_forward.1} parent=1 // pred_region
      %s378 = ssub.s32 256, 256
      %379 = vsyncadd [#allocation4], %s378
      %s380 = sshll.u32 [#allocation3], 4
      %s381 = int_to_ptr.vmem [resolvable:$true] %s380
      %386 = dma.vmem_to_hbm [thread:$0]  %s381, 256, %s4, [#allocation4], 128, 128, 8
    $region29: #{llama_feed_forward.1} parent=1 // pred_fallthru
      _
    // Predicated region
    $region30: #{llama_feed_forward.1} parent=1 // pred_check
      _
    $region31: #{llama_feed_forward.1} parent=1 // pred_check_branch
      %388 = sbr.rel (0) target = $region33
    $region32: #{llama_feed_forward.1} parent=1 // pred_region
      %389 = dma.done [#allocation4], 256
    $region33: #{llama_feed_forward.1} parent=1 // pred_fallthru
      _
    %390 = vsyncpa [#allocation4], 1

</llo_original>
